<compile_context>
chip_gen: v7x
topology: tpu7x:2x2x1
jax: 0.10.0
libtpu: 0.0.40
codegen_flags: <defaults>
</compile_context>

<pallas_src>
import functools

import jax
import jax.numpy as jnp
from jax.experimental import pallas as pl
from jax.experimental.pallas import tpu as pltpu


def _round_up(v, m):
    return (v + m - 1) // m * m


def _cdiv(a, b):
    return -(-a // b)


def _balanced_tiles(size, cap, mult):
    """Tile size <= cap, multiple of mult, minimizing total padding."""
    size_c = _round_up(max(size, 1), mult)
    n = max(1, _cdiv(size_c, cap))
    t = _round_up(_cdiv(size_c, n), mult)
    return t, n, t * n


def _forced_tiles(size_c, n, mult):
    t = _round_up(_cdiv(size_c, n), mult)
    return t, n, t * n


def _gl_kernel_direct(x_ref, w_ref, b_ref, o_ref, *, feed_bf16):
    """f32 output path: accumulate directly into the resident output block."""
    k = pl.program_id(2)

    @pl.when(k == 0)
    def _():
        o_ref[...] = jnp.zeros_like(o_ref)

    x = x_ref[...]
    w = w_ref[...]
    if feed_bf16:
        x = x.astype(jnp.bfloat16)
        w = w.astype(jnp.bfloat16)
    o_ref[...] += jnp.dot(x, w, preferred_element_type=jnp.float32)

    @pl.when(k == pl.num_programs(2) - 1)
    def _():
        o_ref[...] += b_ref[...]


def _gl_kernel_acc(x_ref, w_ref, b_ref, o_ref, acc_ref, *, feed_bf16):
    """Non-f32 output path: separate f32 accumulator scratch, cast on store."""
    k = pl.program_id(2)

    @pl.when(k == 0)
    def _():
        acc_ref[...] = jnp.zeros_like(acc_ref)

    x = x_ref[...]
    w = w_ref[...]
    if feed_bf16:
        x = x.astype(jnp.bfloat16)
        w = w.astype(jnp.bfloat16)
    acc_ref[...] += jnp.dot(x, w, preferred_element_type=jnp.float32)

    @pl.when(k == pl.num_programs(2) - 1)
    def _():
        o_ref[...] = (acc_ref[...] + b_ref[...]).astype(o_ref.dtype)


def _vmem_capacity_bytes():
    try:
        info = pltpu.get_tpu_info()
        cap = getattr(info, "vmem_capacity_bytes", None)
        if cap:
            return int(cap)
    except Exception:
        pass
    return 64 * 2 ** 20  # conservative (v7x-like) default


@functools.partial(
    jax.jit,
    static_argnames=("mxu_bf16", "small_problem_fallback", "tm_cap", "tn_cap", "tk_cap"))
def graph_linear(x, weight, bias=None, *, mxu_bf16=False,
                 small_problem_fallback=True, tm_cap=None, tn_cap=None, tk_cap=None):
    """Pallas equivalent of GraphLinear.forward.

    Args:
      x:      float array of shape (..., in_size)
      weight: (out_size, in_size)  -- torch nn.Linear layout
      bias:   (out_size,) or None
      mxu_bf16: feed bf16 to the MXU (f32 accumulation kept); looser numerics.
      small_problem_fallback: tiny/degenerate problems dispatch to plain XLA.
      tm_cap/tn_cap/tk_cap: optional tile-size cap overrides.
    Returns:
      array of shape (..., out_size), same dtype as x.
    """
    in_size = x.shape[-1]
    out_size = weight.shape[0]
    lead = x.shape[:-1]
    out_dtype = x.dtype

    x2d = x.reshape(-1, in_size)
    m = x2d.shape[0]

    def _xla_path():
        y = jnp.dot(x2d, weight.T, preferred_element_type=jnp.float32)
        if bias is not None:
            y = y + bias.astype(jnp.float32)
        return y.astype(out_dtype).reshape(lead + (out_size,))

    # Degenerate shapes always, tiny problems optionally, go to plain XLA.
    if m == 0 or in_size == 0 or out_size == 0:
        return _xla_path()
    if small_problem_fallback and (m * in_size * out_size) < (1 << 20):
        return _xla_path()

    # ---- generation-aware tile caps and VMEM budget -------------------------
    vmem_cap = _vmem_capacity_bytes()
    big_vmem = vmem_cap >= 100 * 2 ** 20          # v5e/v6e: 128 MiB; v7x: 64 MiB/TC
    if big_vmem:
        d_tm, d_tk, d_tn, vmem_ceiling = 2048, 1024, 512, 96 * 2 ** 20
    else:
        d_tm, d_tk, d_tn, vmem_ceiling = 1024, 512, 512, 48 * 2 ** 20

    x_item = jnp.dtype(x.dtype).itemsize
    w_item = jnp.dtype(weight.dtype).itemsize
    out_item = jnp.dtype(out_dtype).itemsize
    sub_mult = max(8, 32 // x_item)               # dtype-dependent sublane multiple

    tm_cap_e = _round_up(tm_cap if tm_cap else d_tm, sub_mult)
    tk_cap_e = _round_up(tk_cap if tk_cap else d_tk, 256)
    tn_cap_e = _round_up(tn_cap if tn_cap else d_tn, 128)

    # ---- M tiling: minimal padding; >=2 (even) i-tiles on 2-TC parts --------
    m_c = _round_up(m, sub_mult)
    tm_e, n_i, m_pad = _balanced_tiles(m_c, tm_cap_e, sub_mult)
    split_rows = 512 if not big_vmem else 1024
    if n_i == 1 and m_c >= split_rows:
        tm_e, n_i, m_pad = _forced_tiles(m_c, 2, sub_mult)
    if (not big_vmem) and n_i > 1 and (n_i % 2 == 1):
        tm_e, n_i, m_pad = _forced_tiles(m_c, n_i + 1, sub_mult)

    # ---- K tiling: prefer 256-deep MXU passes unless that adds padding ------
    tk_a, nk_a, kp_a = _balanced_tiles(in_size, tk_cap_e, 256)
    tk_b, nk_b, kp_b = _balanced_tiles(in_size, tk_cap_e, 128)
    tk_e, n_k, k_pad = (tk_a, nk_a, kp_a) if kp_a <= kp_b else (tk_b, nk_b, kp_b)

    # ---- N tiling (lane-dense output) ----------------------------------------
    tn_e, n_j, n_pad = _balanced_tiles(out_size, tn_cap_e, 128)

    # ---- operands: pad only when needed; weight pre-transposed once ---------
    x_p = x2d
    if m_pad != m or k_pad != in_size:
        x_p = jnp.pad(x2d, ((0, m_pad - m), (0, k_pad - in_size)))

    w_t = weight.T                                # (K, N): no per-step XLU transpose
    if k_pad != in_size or n_pad != out_size:
        w_t = jnp.pad(w_t, ((0, k_pad - in_size), (0, n_pad - out_size)))

    if bias is None:
        b_p = jnp.zeros((1, n_pad), jnp.float32)
    else:
        b_f = bias.astype(jnp.float32)
        if n_pad != out_size:
            b_f = jnp.pad(b_f, (0, n_pad - out_size))
        b_p = b_f.reshape(1, n_pad)

    direct = (jnp.dtype(out_dtype) == jnp.float32)

    vmem_bill = (2 * (tm_e * tk_e * x_item + tk_e * tn_e * w_item + tn_e * 4)
                 + 2 * tm_e * tn_e * out_item
                 + (0 if direct else tm_e * tn_e * 4))
    vmem_limit = int(min(max(int(1.5 * vmem_bill), 32 * 2 ** 20), vmem_ceiling))

    cost = pl.CostEstimate(
        flops=2 * m_pad * k_pad * n_pad,
        transcendentals=0,
        bytes_accessed=(m_pad * k_pad * n_j * x_item      # x re-read per j tile
                        + k_pad * n_pad * n_i * w_item    # w re-read per i tile
                        + n_pad * 4
                        + m_pad * n_pad * out_item))

    compiler_params = pltpu.CompilerParams(
        dimension_semantics=("parallel", "parallel", "arbitrary"),
        vmem_limit_bytes=vmem_limit)

    grid = (n_i, n_j, n_k)
    x_spec = pl.BlockSpec((tm_e, tk_e), lambda i, j, k: (i, k))
    w_spec = pl.BlockSpec((tk_e, tn_e), lambda i, j, k: (k, j))
    b_spec = pl.BlockSpec((1, tn_e), lambda i, j, k: (0, j))
    o_spec = pl.BlockSpec((tm_e, tn_e), lambda i, j, k: (i, j))

    if direct:
        kernel = functools.partial(_gl_kernel_direct, feed_bf16=mxu_bf16)
        scratch = []
    else:
        kernel = functools.partial(_gl_kernel_acc, feed_bf16=mxu_bf16)
        scratch = [pltpu.VMEM((tm_e, tn_e), jnp.float32)]

    y_p = pl.pallas_call(
        kernel,
        out_shape=jax.ShapeDtypeStruct((m_pad, n_pad), out_dtype),
        grid_spec=pltpu.PrefetchScalarGridSpec(
            num_scalar_prefetch=0,
            grid=grid,
            in_specs=[x_spec, w_spec, b_spec],
            out_specs=o_spec,
            scratch_shapes=scratch),
        compiler_params=compiler_params,
        cost_estimate=cost,
    )(x_p, w_t, b_p)

    y2d = y_p
    if m_pad != m or n_pad != out_size:
        y2d = y_p[:m, :out_size]
    return y2d.reshape(lead + (out_size,))


def _reference(x, weight, bias):
    y = jnp.dot(x.reshape(-1, x.shape[-1]), weight.T,
                precision=jax.lax.Precision.HIGHEST)
    if bias is not None:
        y = y + bias
    return y.reshape(x.shape[:-1] + (weight.shape[0],))


if __name__ == "__main__":
    key = jax.random.PRNGKey(0)
    kx, kw, kb, kx2, kw2, kb2 = jax.random.split(key, 6)

    # ---- test 1: canonical tiny 3-D GraphLinear case -------------------------
    # GraphLinear(in_size=32, out_size=16) on x: (batch=2, num_nodes=8, 32)
    batch, num_nodes, in_size, out_size = 2, 8, 32, 16
    x = jax.random.normal(kx, (batch, num_nodes, in_size), dtype=jnp.float32)
    w = 0.1 * jax.random.normal(kw, (out_size, in_size), dtype=jnp.float32)
    b = 0.1 * jax.random.normal(kb, (out_size,), dtype=jnp.float32)
    y_ref = _reference(x, w, b)

    # Force the Pallas path on the tiny shape (correctness of the kernel itself).
    y = jax.block_until_ready(graph_linear(x, w, b, small_problem_fallback=False))
    assert y.shape == (batch, num_nodes, out_size)
    assert jnp.allclose(y, y_ref, atol=1e-3, rtol=1e-3), "tiny-shape mismatch"

    # Default dispatch (tiny shapes fall back to plain XLA) must agree too.
    y_fb = jax.block_until_ready(graph_linear(x, w, b))
    assert jnp.allclose(y_fb, y_ref, atol=1e-3, rtol=1e-3), "fallback mismatch"

    # No-bias path through the Pallas kernel.
    y_nb = jax.block_until_ready(graph_linear(x, w, None, small_problem_fallback=False))
    assert jnp.allclose(y_nb, _reference(x, w, None), atol=1e-3, rtol=1e-3), \
        "no-bias mismatch"

    # ---- test 2: exercises M/K/N tiling and K accumulation -------------------
    b2, n2, k2, o2 = 4, 160, 1536, 384   # M=640, multiple K tiles on every generation
    x2 = jax.random.normal(kx2, (b2, n2, k2), dtype=jnp.float32)
    w2 = 0.05 * jax.random.normal(kw2, (o2, k2), dtype=jnp.float32)
    bb2 = 0.1 * jax.random.normal(kb2, (o2,), dtype=jnp.float32)
    y2_ref = _reference(x2, w2, bb2)

    y2 = jax.block_until_ready(graph_linear(x2, w2, bb2))
    assert y2.shape == (b2, n2, o2)
    assert jnp.allclose(y2, y2_ref, atol=3e-2, rtol=1e-2), "tiled-shape mismatch"

    # Opt-in bf16 MXU feed (f32 accumulation), looser tolerance.
    y2_bf = jax.block_until_ready(graph_linear(x2, w2, bb2, mxu_bf16=True))
    assert jnp.allclose(y2_bf, y2_ref, atol=0.25, rtol=0.05), "bf16-feed mismatch"

    print("KERNEL_OK")
</pallas_src>

<mosaic_0001>
module attributes {stable_mosaic.version = 11 : i64} {
  func.func @_gl_kernel_direct(%arg0: i32, %arg1: i32, %arg2: i32, %arg3: memref<16x128xf32, #tpu.memory_space<vmem>>, %arg4: memref<128x128xf32, #tpu.memory_space<vmem>>, %arg5: memref<1x128xf32, #tpu.memory_space<vmem>>, %arg6: memref<16x128xf32, #tpu.memory_space<vmem>>) attributes {dimension_semantics = [#tpu.dimension_semantics<parallel>, #tpu.dimension_semantics<parallel>, #tpu.dimension_semantics<arbitrary>], iteration_bounds = array<i64: 1, 1, 1>, scalar_prefetch = 0 : i64, scratch_operands = 0 : i64, tpu.core_type = #tpu.core_type<tc>, window_params = [{transform_indices = @transform_0, window_bounds = array<i64: 16, 128>}, {transform_indices = @transform_1, window_bounds = array<i64: 128, 128>}, {transform_indices = @transform_2, window_bounds = array<i64: 1, 128>}, {transform_indices = @transform_3, window_bounds = array<i64: 16, 128>}]} {
    %c0_i32 = arith.constant 0 : i32
    %0 = arith.cmpi eq, %arg2, %c0_i32 : i32
    %1 = arith.extui %0 : i1 to i32
    %c0_i32_0 = arith.constant 0 : i32
    %2 = arith.cmpi ne, %1, %c0_i32_0 : i32
    scf.if %2 {
      %cst_10 = arith.constant 0.000000e+00 : f32
      %12 = vector.broadcast %cst_10 : f32 to vector<16x128xf32>
      %c0_11 = arith.constant 0 : index
      %c0_12 = arith.constant 0 : index
      %13 = vector.load %arg6[%c0_11, %c0_12] : memref<16x128xf32, #tpu.memory_space<vmem>>, vector<16x128xf32>
      tpu.vector_store %arg6[%c0_11, %c0_12], %12 {strides = array<i32>} : memref<16x128xf32, #tpu.memory_space<vmem>>, vector<16x128xf32>,
    } else {
    }
    %c0 = arith.constant 0 : index
    %c0_1 = arith.constant 0 : index
    %3 = vector.load %arg3[%c0, %c0_1] : memref<16x128xf32, #tpu.memory_space<vmem>>, vector<16x128xf32>
    %c0_2 = arith.constant 0 : index
    %c0_3 = arith.constant 0 : index
    %4 = vector.load %arg4[%c0_2, %c0_3] : memref<128x128xf32, #tpu.memory_space<vmem>>, vector<128x128xf32>
    %c0_4 = arith.constant 0 : index
    %c0_5 = arith.constant 0 : index
    %5 = vector.load %arg6[%c0_4, %c0_5] : memref<16x128xf32, #tpu.memory_space<vmem>>, vector<16x128xf32>
    %cst = arith.constant dense<0.000000e+00> : vector<16x128xf32>
    %6 = tpu.matmul %3, %4, %cst {dimension_numbers = #tpu.dot_dimension_numbers<[1], [0], [0], [1], [0, 0, 1, 1], [], []>} : vector<16x128xf32>, vector<128x128xf32>, vector<16x128xf32> -> vector<16x128xf32>
    %7 = arith.addf %5, %6 : vector<16x128xf32>
    %c0_6 = arith.constant 0 : index
    %c0_7 = arith.constant 0 : index
    %8 = vector.load %arg6[%c0_6, %c0_7] : memref<16x128xf32, #tpu.memory_space<vmem>>, vector<16x128xf32>
    tpu.vector_store %arg6[%c0_6, %c0_7], %7 {strides = array<i32>} : memref<16x128xf32, #tpu.memory_space<vmem>>, vector<16x128xf32>,
    %c0_i32_8 = arith.constant 0 : i32
    %9 = arith.cmpi eq, %arg2, %c0_i32_8 : i32
    %10 = arith.extui %9 : i1 to i32
    %c0_i32_9 = arith.constant 0 : i32
    %11 = arith.cmpi ne, %10, %c0_i32_9 : i32
    scf.if %11 {
      %c0_10 = arith.constant 0 : index
      %c0_11 = arith.constant 0 : index
      %12 = vector.load %arg6[%c0_10, %c0_11] : memref<16x128xf32, #tpu.memory_space<vmem>>, vector<16x128xf32>
      %c0_12 = arith.constant 0 : index
      %c0_13 = arith.constant 0 : index
      %13 = vector.load %arg5[%c0_12, %c0_13] : memref<1x128xf32, #tpu.memory_space<vmem>>, vector<1x128xf32>
      %14 = vector.broadcast %13 : vector<1x128xf32> to vector<16x128xf32>
      %15 = arith.addf %12, %14 : vector<16x128xf32>
      %c0_14 = arith.constant 0 : index
      %c0_15 = arith.constant 0 : index
      %16 = vector.load %arg6[%c0_14, %c0_15] : memref<16x128xf32, #tpu.memory_space<vmem>>, vector<16x128xf32>
      tpu.vector_store %arg6[%c0_14, %c0_15], %15 {strides = array<i32>} : memref<16x128xf32, #tpu.memory_space<vmem>>, vector<16x128xf32>,
    } else {
    }
    return
  }
  func.func @transform_0(%arg0: i32, %arg1: i32, %arg2: i32) -> (i32, i32) {
    %c0_i32 = arith.constant 0 : i32
    return %arg0, %arg2 : i32, i32
  }
  func.func @transform_1(%arg0: i32, %arg1: i32, %arg2: i32) -> (i32, i32) {
    %c0_i32 = arith.constant 0 : i32
    return %arg2, %arg1 : i32, i32
  }
  func.func @transform_2(%arg0: i32, %arg1: i32, %arg2: i32) -> (i32, i32) {
    %c0_i32 = arith.constant 0 : i32
    %c0_i32_0 = arith.constant 0 : i32
    return %c0_i32, %arg1 : i32, i32
  }
  func.func @transform_3(%arg0: i32, %arg1: i32, %arg2: i32) -> (i32, i32) {
    %c0_i32 = arith.constant 0 : i32
    return %arg0, %arg1 : i32, i32
  }
}

</mosaic_0001>

<llo_original>
// kernel: graph_linear.1
$region0: #{graph_linear.1}
  #allocation0 [shape = 'u32[]', space=smem, size = 0x4, offset = 0x4, fixed_abs, tag = 'smem constant byte address 0x4 - core index']
  #allocation1 [shape = 'u32[144,128]{1,0:T(1,128)}', space=vmem, size = 0x12000, scoped, tag = 'internal scratch']
  %s0 = inlined_call_operand.vmem [shape: f32[16,128], index: 0, kind: input, shape index: {}]
  %s1 = inlined_call_operand.vmem [shape: f32[128,128], index: 1, kind: input, shape index: {}]
  %s2 = inlined_call_operand.vmem [shape: f32[1,128], index: 2, kind: input, shape index: {}]
  %s3 = inlined_call_operand.vmem [shape: f32[16,128], index: 3, kind: output, shape index: {}]
  %s4 = sld [smem:[#allocation0]]
  $region30: #{graph_linear.1} parent=0
    _
  %s6 = ssub.s32 1, %s4
  %s7 = scalar_select 0, %s6, %s4
  // Predicated region
  $region2: #{graph_linear.1} parent=0 // pred_check
    _
  $region3: #{graph_linear.1} parent=0 // pred_check_branch
    %9 = sbr.rel (0) target = $region5
  $region4: #{graph_linear.1} parent=0 // pred_region
    _
  $region5: #{graph_linear.1} parent=0 // pred_fallthru
    _
  // Predicated region
  $region6: #{graph_linear.1} parent=0 // pred_check
    _
  $region7: #{graph_linear.1} parent=0 // pred_check_branch
    %11 = sbr.rel (0) target = $region9
  $region8: #{graph_linear.1} parent=0 // pred_region
    _
  $region9: #{graph_linear.1} parent=0 // pred_fallthru
    _
  // Predicated region
  $region10: #{graph_linear.1} parent=0 // pred_check
    _
  $region11: #{graph_linear.1} parent=0 // pred_check_branch
    %13 = sbr.rel (0) target = $region13
  $region12: #{graph_linear.1} parent=0 // pred_region
    _
  $region13: #{graph_linear.1} parent=0 // pred_fallthru
    _
  %p14 = scmp.eq.s32.totalorder 0, 0
  // Predicated region
  $region14: #{graph_linear.1} parent=0 // pred_check
    %p15 = pneg %p14
  $region15: #{graph_linear.1} parent=0 // pred_check_branch
    %17 = sbr.rel (%p15) target = $region17
  $region16: #{graph_linear.1} parent=0 // pred_region
    %18 = vst [vmem:[%s3] sm:$0xff] 0.0
    %19 = vst [vmem:[%s3 + $0x8] sm:$0xff] 0.0
  $region17: #{graph_linear.1} parent=0 // pred_fallthru
    _
  %v20 = vld [vmem:[%s0] sm:$0xff]
  %v21 = vld [vmem:[%s0 + $0x8] sm:$0xff]
  %v22 = vld [vmem:[%s1] sm:$0xff]
  %v23 = vld [vmem:[%s1 + $0x8] sm:$0xff]
  %v24 = vld [vmem:[%s1 + $0x10] sm:$0xff]
  %v25 = vld [vmem:[%s1 + $0x18] sm:$0xff]
  %v26 = vld [vmem:[%s1 + $0x20] sm:$0xff]
  %v27 = vld [vmem:[%s1 + $0x28] sm:$0xff]
  %v28 = vld [vmem:[%s1 + $0x30] sm:$0xff]
  %v29 = vld [vmem:[%s1 + $0x38] sm:$0xff]
  %v30 = vld [vmem:[%s1 + $0x40] sm:$0xff]
  %v31 = vld [vmem:[%s1 + $0x48] sm:$0xff]
  %v32 = vld [vmem:[%s1 + $0x50] sm:$0xff]
  %v33 = vld [vmem:[%s1 + $0x58] sm:$0xff]
  %v34 = vld [vmem:[%s1 + $0x60] sm:$0xff]
  %v35 = vld [vmem:[%s1 + $0x68] sm:$0xff]
  %v36 = vld [vmem:[%s1 + $0x70] sm:$0xff]
  %v37 = vld [vmem:[%s1 + $0x78] sm:$0xff]
  %v38 = vld [vmem:[%s3] sm:$0xff]
  %v39 = vld [vmem:[%s3 + $0x8] sm:$0xff]
  %40 = vmatprep.subr.mxu0 0.0
  %41 = vmatpush1.msra.mxu0 %v22
  %42 = vmatprep.subr.mxu0 0.0
  %43 = vmatpush1.msra.mxu0 %v23
  %44 = vmatprep.subr.mxu0 0.0
  %45 = vmatpush1.msra.mxu0 %v24
  %46 = vmatprep.subr.mxu0 0.0
  %47 = vmatpush1.msra.mxu0 %v25
  %48 = vmatprep.subr.mxu0 0.0
  %49 = vmatpush1.msra.mxu0 %v26
  %50 = vmatprep.subr.mxu0 0.0
  %51 = vmatpush1.msra.mxu0 %v27
  %52 = vmatprep.subr.mxu0 0.0
  %53 = vmatpush1.msra.mxu0 %v28
  %54 = vmatprep.subr.mxu0 0.0
  %55 = vmatpush1.msra.mxu0 %v29
  %56 = vmatprep.subr.mxu0 0.0
  %57 = vmatpush1.msra.mxu0 %v30
  %58 = vmatprep.subr.mxu0 0.0
  %59 = vmatpush1.msra.mxu0 %v31
  %60 = vmatprep.subr.mxu0 0.0
  %61 = vmatpush1.msra.mxu0 %v32
  %62 = vmatprep.subr.mxu0 0.0
  %63 = vmatpush1.msra.mxu0 %v33
  %64 = vmatprep.subr.mxu0 0.0
  %65 = vmatpush1.msra.mxu0 %v34
  %66 = vmatprep.subr.mxu0 0.0
  %67 = vmatpush1.msra.mxu0 %v35
  %68 = vmatprep.subr.mxu0 0.0
  %69 = vmatpush1.msra.mxu0 %v36
  %70 = vmatprep.subr.mxu0 0.0
  %71 = vmatpush1.msra.mxu0 %v37
  %72 = vmatprep.subr.mxu0 0.0
  %73 = vmatpush1.msra.mxu0 0.0
  %74 = vmatprep.subr.mxu0 0.0
  %75 = vmatpush1.msra.mxu0 0.0
  %76 = vmatprep.subr.mxu0 0.0
  %77 = vmatpush1.msra.mxu0 0.0
  %78 = vmatprep.subr.mxu0 0.0
  %79 = vmatpush1.msra.mxu0 0.0
  %80 = vmatprep.subr.mxu0 0.0
  %81 = vmatpush1.msra.mxu0 0.0
  %82 = vmatprep.subr.mxu0 0.0
  %83 = vmatpush1.msra.mxu0 0.0
  %84 = vmatprep.subr.mxu0 0.0
  %85 = vmatpush1.msra.mxu0 0.0
  %86 = vmatprep.subr.mxu0 0.0
  %87 = vmatpush1.msra.mxu0 0.0
  %88 = vmatprep.subr.mxu0 0.0
  %89 = vmatpush1.msra.mxu0 0.0
  %90 = vmatprep.subr.mxu0 0.0
  %91 = vmatpush1.msra.mxu0 0.0
  %92 = vmatprep.subr.mxu0 0.0
  %93 = vmatpush1.msra.mxu0 0.0
  %94 = vmatprep.subr.mxu0 0.0
  %95 = vmatpush1.msra.mxu0 0.0
  %96 = vmatprep.subr.mxu0 0.0
  %97 = vmatpush1.msra.mxu0 0.0
  %98 = vmatprep.subr.mxu0 0.0
  %99 = vmatpush1.msra.mxu0 0.0
  %100 = vmatprep.subr.mxu0 0.0
  %101 = vmatpush1.msra.mxu0 0.0
  %102 = vmatprep.subr.mxu0 0.0
  %103 = vmatpush1.msra.mxu0 0.0
  %104 = vmatprep.mubr.f32.mxu0 0.0
  %105 = vmatmul.mubr.f32.gmra.mrb[0].mxu0 %v20
  %v106 = vpop.f32.mrb[0].mxu0
  %v107 = vadd.f32 0.0, %v106
  %v108 = vpop.f32.mrb[0].mxu0
  %109 = vmatprep.mubr.f32.mxu0 0.0
  %110 = vmatmul.mubr.f32.gmra.mrb[0].mxu0 %v21
  %v111 = vpop.f32.mrb[0].mxu0
  %v112 = vadd.f32 0.0, %v111
  %v113 = vpop.f32.mrb[0].mxu0
  %114 = vdwg.mxu0
  %v115 = vadd.f32 %v38, %v107
  %v116 = vadd.f32 %v39, %v112
  %117 = vst [vmem:[%s3] sm:$0xff] %v115
  %118 = vst [vmem:[%s3 + $0x8] sm:$0xff] %v116
  // Predicated region
  $region18: #{graph_linear.1} parent=0 // pred_check
    %p119 = pneg %p14
  $region19: #{graph_linear.1} parent=0 // pred_check_branch
    %121 = sbr.rel (%p119) target = $region21
  $region20: #{graph_linear.1} parent=0 // pred_region
    %v122 = vld [vmem:[%s3] sm:$0xff]
    %v123 = vld [vmem:[%s3 + $0x8] sm:$0xff]
    %v124 = vld [vmem:[%s2] sm:$0x1]
    %v126 = vlaneseq
    %v127 = vshrl.u32 %v126, 7
    %v128 = vsub.s32 0, %v127
    %v129 = vrot.slane %v124, %v128
    %v131 = vadd.f32 %v122, %v129
    %v132 = vadd.f32 %v123, %v129
    %133 = vst [vmem:[%s3] sm:$0xff] %v131
    %134 = vst [vmem:[%s3 + $0x8] sm:$0xff] %v132
  $region21: #{graph_linear.1} parent=0 // pred_fallthru
    _
  // Predicated region
  $region22: #{graph_linear.1} parent=0 // pred_check
    _
  $region23: #{graph_linear.1} parent=0 // pred_check_branch
    %136 = sbr.rel (0) target = $region25
  $region24: #{graph_linear.1} parent=0 // pred_region
    _
  $region25: #{graph_linear.1} parent=0 // pred_fallthru
    _
  // Predicated region
  $region26: #{graph_linear.1} parent=0 // pred_check
    _
  $region27: #{graph_linear.1} parent=0 // pred_check_branch
    %138 = sbr.rel (0) target = $region29
  $region28: #{graph_linear.1} parent=0 // pred_region
    _
  $region29: #{graph_linear.1} parent=0 // pred_fallthru
    _

</llo_original>
